<compile_context>
chip_gen: v7x
topology: tpu7x:2x2x1
jax: 0.10.0
libtpu: 0.0.40
codegen_flags: <defaults>
</compile_context>

<pallas_src>
import functools

import jax
import jax.numpy as jnp
import numpy as np
from jax.experimental import pallas as pl
from jax.experimental.pallas import tpu as pltpu

LANE = 128


def _round_up(x, m):
    return (x + m - 1) // m * m


# ---------------------------------------------------------------------------
# Kernel
# ---------------------------------------------------------------------------
def _realnvp_kernel(half,
                    x_ref, obs_ref,
                    w1l_ref, w1o_ref, b1_ref, w2_ref, b2_ref, w3_ref, b3_ref,
                    z_ref, ld_ref):
    """One batch tile of the RealNVP_cond forward pass.

    x_ref   : (dim, tb)       f32  -- transposed input, batch on lanes
    obs_ref : (obser_dim, tb) f32
    w*_ref  : (2, ...)             -- fused (t|s) conditioner params, stacked
                                      over the two couplings (bf16 weights,
                                      f32 biases), VMEM-resident
    z_ref   : (dim, tb)       f32
    ld_ref  : (1, tb)         f32  -- log-determinant, lane-dense
    """
    x = x_ref[...]                       # f32
    lower = x[:half, :]
    upper = x[half:, :]
    obs_bf = obs_ref[...].astype(jnp.bfloat16)

    def fused_ts(c, feat_f32):
        # Both nets (t and s) of coupling `c` in one pass: t rows then s rows.
        feat_bf = feat_f32.astype(jnp.bfloat16)
        h = jnp.dot(w1l_ref[c], feat_bf, preferred_element_type=jnp.float32)
        h += jnp.dot(w1o_ref[c], obs_bf, preferred_element_type=jnp.float32)
        h = jnp.tanh(h + b1_ref[c])                       # f32 elementwise
        h = jnp.dot(w2_ref[c], h.astype(jnp.bfloat16),
                    preferred_element_type=jnp.float32)
        h = jnp.tanh(h + b2_ref[c])
        o = jnp.dot(w3_ref[c], h.astype(jnp.bfloat16),
                    preferred_element_type=jnp.float32)
        o = o + b3_ref[c]
        return o[:half, :], o[half:, :]                   # t, s  (f32)

    t1, s1 = fused_ts(0, lower)
    new_upper = t1 + upper * jnp.exp(s1)

    t2, s2 = fused_ts(1, new_upper)
    new_lower = t2 + lower * jnp.exp(s2)

    z_ref[...] = jnp.concatenate([new_lower, new_upper], axis=0)
    ld_ref[...] = (jnp.sum(s1, axis=0, keepdims=True)
                   + jnp.sum(s2, axis=0, keepdims=True))


# ---------------------------------------------------------------------------
# Host-side weight packing + pallas_call wrapper
# ---------------------------------------------------------------------------
def _pack_coupling(t_params, s_params):
    """Fuse an (t, s) FCNN pair: layer-1 weights stacked along the output dim
    (and split along the input dim into lower/obser halves, matching the
    torch.cat([lower, obser]) order), layers 2/3 block-diagonal."""
    Wt1, bt1, Wt2, bt2, Wt3, bt3 = t_params
    Ws1, bs1, Ws2, bs2, Ws3, bs3 = s_params
    hid = Wt1.shape[0]
    half = Wt3.shape[0]

    W1 = jnp.concatenate([Wt1, Ws1], axis=0)              # (2H, half+obs)
    W1_low, W1_obs = W1[:, :half], W1[:, half:]
    b1 = jnp.concatenate([bt1, bs1])[:, None]             # (2H, 1)

    W2 = jnp.zeros((2 * hid, 2 * hid), jnp.float32)
    W2 = W2.at[:hid, :hid].set(Wt2).at[hid:, hid:].set(Ws2)
    b2 = jnp.concatenate([bt2, bs2])[:, None]

    W3 = jnp.zeros((2 * half, 2 * hid), jnp.float32)
    W3 = W3.at[:half, :hid].set(Wt3).at[half:, hid:].set(Ws3)
    b3 = jnp.concatenate([bt3, bs3])[:, None]
    return W1_low, W1_obs, b1, W2, b2, W3, b3


@jax.jit
def realnvp_cond_forward(params, x, obser):
    """Pallas-TPU equivalent of RealNVP_cond.forward.

    params = (t1, s1, t2, s2); each is an FCNN tuple (W1, b1, W2, b2, W3, b3)
             with PyTorch (out_features, in_features) weight layout.
    x      : (B, dim)       float32
    obser  : (B, obser_dim) float32
    returns (z, log_det) with z (B, dim), log_det (B,)
    """
    t1, s1, t2, s2 = params
    B, dim = x.shape
    obser_dim = obser.shape[1]
    half = dim // 2

    # --- fuse t/s conditioners, stack the two couplings, bf16 MXU weights ---
    c1 = _pack_coupling(t1, s1)
    c2 = _pack_coupling(t2, s2)
    w1l, w1o, b1, w2, b2, w3, b3 = (
        jnp.stack([a, b], axis=0) for a, b in zip(c1, c2))
    w1l, w1o, w2, w3 = (w.astype(jnp.bfloat16) for w in (w1l, w1o, w2, w3))

    # --- batch tiling: batch maps to lanes, pad to a multiple of the tile ---
    if B <= 512:
        block_b = _round_up(max(B, 1), LANE)
    else:
        block_b = 512
    padded_B = _round_up(B, block_b)
    grid = (padded_B // block_b,)

    xT = jnp.zeros((dim, padded_B), jnp.float32).at[:, :B].set(x.T)
    obsT = jnp.zeros((obser_dim, padded_B), jnp.float32).at[:, :B].set(obser.T)

    const = lambda i: (0, 0, 0)                       # resident-parameter map

    def batch_spec(rows):
        return pl.BlockSpec((rows, block_b), lambda i: (0, i))

    kernel = functools.partial(_realnvp_kernel, half)
    zT, ldT = pl.pallas_call(
        kernel,
        out_shape=(jax.ShapeDtypeStruct((dim, padded_B), jnp.float32),
                   jax.ShapeDtypeStruct((1, padded_B), jnp.float32)),
        grid_spec=pltpu.PrefetchScalarGridSpec(
            num_scalar_prefetch=0,
            grid=grid,
            in_specs=[
                batch_spec(dim),                      # x^T       (per tile)
                batch_spec(obser_dim),                # obser^T   (per tile)
                pl.BlockSpec(w1l.shape, const),       # params: DMA'd once,
                pl.BlockSpec(w1o.shape, const),       # VMEM-resident across
                pl.BlockSpec(b1.shape, const),        # the whole grid
                pl.BlockSpec(w2.shape, const),
                pl.BlockSpec(b2.shape, const),
                pl.BlockSpec(w3.shape, const),
                pl.BlockSpec(b3.shape, const),
            ],
            out_specs=(
                batch_spec(dim),                      # z^T
                batch_spec(1),                        # log_det (lane-dense)
            ),
        ),
        compiler_params=pltpu.CompilerParams(
            dimension_semantics=("parallel",),        # megacore on v7x
            vmem_limit_bytes=32 * 1024 * 1024,        # safe on v5e/v6e/v7x
        ),
    )(xT, obsT, w1l, w1o, b1, w2, b2, w3, b3)

    z = zT[:, :B].T
    log_det = ldT[0, :B]
    return z, log_det


# ---------------------------------------------------------------------------
# Pure-JAX reference (mirrors the PyTorch module) + demo
# ---------------------------------------------------------------------------
def _init_fcnn(key, in_dim, out_dim, hidden, std=0.1):
    k = jax.random.split(key, 6)
    W1 = std * jax.random.normal(k[0], (hidden, in_dim), jnp.float32)
    b1 = 0.05 * jax.random.normal(k[1], (hidden,), jnp.float32)
    W2 = std * jax.random.normal(k[2], (hidden, hidden), jnp.float32)
    b2 = 0.05 * jax.random.normal(k[3], (hidden,), jnp.float32)
    W3 = std * jax.random.normal(k[4], (out_dim, hidden), jnp.float32)
    b3 = 0.05 * jax.random.normal(k[5], (out_dim,), jnp.float32)
    return (W1, b1, W2, b2, W3, b3)


def _fcnn_ref(p, x):
    W1, b1, W2, b2, W3, b3 = p
    h = jnp.tanh(x @ W1.T + b1)
    h = jnp.tanh(h @ W2.T + b2)
    return h @ W3.T + b3


def realnvp_cond_ref(params, x, obser):
    t1, s1, t2, s2 = params
    half = x.shape[1] // 2
    lower, upper = x[:, :half], x[:, half:]
    in1 = jnp.concatenate([lower, obser], axis=-1)
    t1o, s1o = _fcnn_ref(t1, in1), _fcnn_ref(s1, in1)
    upper = t1o + upper * jnp.exp(s1o)
    in2 = jnp.concatenate([upper, obser], axis=-1)
    t2o, s2o = _fcnn_ref(t2, in2), _fcnn_ref(s2, in2)
    lower = t2o + lower * jnp.exp(s2o)
    z = jnp.concatenate([lower, upper], axis=1)
    log_det = jnp.sum(s1o, axis=1) + jnp.sum(s2o, axis=1)
    return z, log_det


if __name__ == "__main__":
    # Small shapes consistent with the module defaults.
    B, dim, obser_dim, hidden = 64, 6, 5, 8
    half = dim // 2

    key = jax.random.PRNGKey(0)
    kp, kx, ko = jax.random.split(key, 3)
    net_keys = jax.random.split(kp, 4)
    params = tuple(_init_fcnn(nk, half + obser_dim, half, hidden)
                   for nk in net_keys)          # (t1, s1, t2, s2)

    x = jax.random.normal(kx, (B, dim), jnp.float32)
    obser = jax.random.normal(ko, (B, obser_dim), jnp.float32)

    z, log_det = realnvp_cond_forward(params, x, obser)
    z, log_det = jax.block_until_ready((z, log_det))

    # Correctness check against the f32 reference (bf16 matmuls -> loose tol).
    z_ref, ld_ref = realnvp_cond_ref(params, x, obser)
    assert z.shape == (B, dim) and log_det.shape == (B,)
    np.testing.assert_allclose(np.asarray(z), np.asarray(z_ref),
                               rtol=5e-2, atol=5e-2)
    np.testing.assert_allclose(np.asarray(log_det), np.asarray(ld_ref),
                               rtol=5e-2, atol=5e-2)

    print("KERNEL_OK")
</pallas_src>

<mosaic_0001>
module attributes {stable_mosaic.version = 11 : i64} {
  func.func @_realnvp_kernel(%arg0: i32, %arg1: memref<6x128xf32, #tpu.memory_space<vmem>>, %arg2: memref<5x128xf32, #tpu.memory_space<vmem>>, %arg3: memref<2x16x3xbf16, #tpu.memory_space<vmem>>, %arg4: memref<2x16x5xbf16, #tpu.memory_space<vmem>>, %arg5: memref<2x16x1xf32, #tpu.memory_space<vmem>>, %arg6: memref<2x16x16xbf16, #tpu.memory_space<vmem>>, %arg7: memref<2x16x1xf32, #tpu.memory_space<vmem>>, %arg8: memref<2x6x16xbf16, #tpu.memory_space<vmem>>, %arg9: memref<2x6x1xf32, #tpu.memory_space<vmem>>, %arg10: memref<6x128xf32, #tpu.memory_space<vmem>>, %arg11: memref<1x128xf32, #tpu.memory_space<vmem>>) attributes {dimension_semantics = [#tpu.dimension_semantics<parallel>], iteration_bounds = array<i64: 1>, scalar_prefetch = 0 : i64, scratch_operands = 0 : i64, tpu.core_type = #tpu.core_type<tc>, window_params = [{transform_indices = @transform_0, window_bounds = array<i64: 6, 128>}, {transform_indices = @transform_1, window_bounds = array<i64: 5, 128>}, {pipeline_mode = #tpu.pipeline_mode<synchronous>, transform_indices = @transform_2, window_bounds = array<i64: 2, 16, 3>}, {pipeline_mode = #tpu.pipeline_mode<synchronous>, transform_indices = @transform_3, window_bounds = array<i64: 2, 16, 5>}, {pipeline_mode = #tpu.pipeline_mode<synchronous>, transform_indices = @transform_4, window_bounds = array<i64: 2, 16, 1>}, {pipeline_mode = #tpu.pipeline_mode<synchronous>, transform_indices = @transform_5, window_bounds = array<i64: 2, 16, 16>}, {pipeline_mode = #tpu.pipeline_mode<synchronous>, transform_indices = @transform_6, window_bounds = array<i64: 2, 16, 1>}, {pipeline_mode = #tpu.pipeline_mode<synchronous>, transform_indices = @transform_7, window_bounds = array<i64: 2, 6, 16>}, {pipeline_mode = #tpu.pipeline_mode<synchronous>, transform_indices = @transform_8, window_bounds = array<i64: 2, 6, 1>}, {transform_indices = @transform_9, window_bounds = array<i64: 6, 128>}, {transform_indices = @transform_10, window_bounds = array<i64: 1, 128>}]} {
    %c0 = arith.constant 0 : index
    %c0_0 = arith.constant 0 : index
    %0 = vector.load %arg1[%c0, %c0_0] : memref<6x128xf32, #tpu.memory_space<vmem>>, vector<6x128xf32>
    %1 = vector.extract_strided_slice %0 {offsets = [0, 0], sizes = [3, 128], strides = [1, 1]} : vector<6x128xf32> to vector<3x128xf32>
    %2 = vector.extract_strided_slice %0 {offsets = [3, 0], sizes = [3, 128], strides = [1, 1]} : vector<6x128xf32> to vector<3x128xf32>
    %c0_1 = arith.constant 0 : index
    %c0_2 = arith.constant 0 : index
    %3 = vector.load %arg2[%c0_1, %c0_2] : memref<5x128xf32, #tpu.memory_space<vmem>>, vector<5x128xf32>
    %4 = arith.truncf %3 : vector<5x128xf32> to vector<5x128xbf16>
    %5 = arith.truncf %1 : vector<3x128xf32> to vector<3x128xbf16>
    %c0_3 = arith.constant 0 : index
    %c0_4 = arith.constant 0 : index
    %c0_5 = arith.constant 0 : index
    %6 = vector.load %arg3[%c0_3, %c0_4, %c0_5] : memref<2x16x3xbf16, #tpu.memory_space<vmem>>, vector<1x16x3xbf16>
    %7 = vector.shape_cast %6 : vector<1x16x3xbf16> to vector<16x3xbf16>
    %cst = arith.constant dense<0.000000e+00> : vector<16x128xf32>
    %8 = tpu.matmul %7, %5, %cst {dimension_numbers = #tpu.dot_dimension_numbers<[1], [0], [0], [1], [0, 0, 1, 1], [], []>} : vector<16x3xbf16>, vector<3x128xbf16>, vector<16x128xf32> -> vector<16x128xf32>
    %c0_6 = arith.constant 0 : index
    %c0_7 = arith.constant 0 : index
    %c0_8 = arith.constant 0 : index
    %9 = vector.load %arg4[%c0_6, %c0_7, %c0_8] : memref<2x16x5xbf16, #tpu.memory_space<vmem>>, vector<1x16x5xbf16>
    %10 = vector.shape_cast %9 : vector<1x16x5xbf16> to vector<16x5xbf16>
    %cst_9 = arith.constant dense<0.000000e+00> : vector<16x128xf32>
    %11 = tpu.matmul %10, %4, %cst_9 {dimension_numbers = #tpu.dot_dimension_numbers<[1], [0], [0], [1], [0, 0, 1, 1], [], []>} : vector<16x5xbf16>, vector<5x128xbf16>, vector<16x128xf32> -> vector<16x128xf32>
    %12 = arith.addf %8, %11 : vector<16x128xf32>
    %c0_10 = arith.constant 0 : index
    %c0_11 = arith.constant 0 : index
    %c0_12 = arith.constant 0 : index
    %13 = vector.load %arg5[%c0_10, %c0_11, %c0_12] : memref<2x16x1xf32, #tpu.memory_space<vmem>>, vector<1x16x1xf32>
    %14 = vector.shape_cast %13 : vector<1x16x1xf32> to vector<16x1xf32>
    %15 = vector.broadcast %14 : vector<16x1xf32> to vector<16x128xf32>
    %16 = arith.addf %12, %15 : vector<16x128xf32>
    %17 = math.tanh %16 : vector<16x128xf32>
    %c0_13 = arith.constant 0 : index
    %c0_14 = arith.constant 0 : index
    %c0_15 = arith.constant 0 : index
    %18 = vector.load %arg6[%c0_13, %c0_14, %c0_15] : memref<2x16x16xbf16, #tpu.memory_space<vmem>>, vector<1x16x16xbf16>
    %19 = vector.shape_cast %18 : vector<1x16x16xbf16> to vector<16x16xbf16>
    %20 = arith.truncf %17 : vector<16x128xf32> to vector<16x128xbf16>
    %cst_16 = arith.constant dense<0.000000e+00> : vector<16x128xf32>
    %21 = tpu.matmul %19, %20, %cst_16 {dimension_numbers = #tpu.dot_dimension_numbers<[1], [0], [0], [1], [0, 0, 1, 1], [], []>} : vector<16x16xbf16>, vector<16x128xbf16>, vector<16x128xf32> -> vector<16x128xf32>
    %c0_17 = arith.constant 0 : index
    %c0_18 = arith.constant 0 : index
    %c0_19 = arith.constant 0 : index
    %22 = vector.load %arg7[%c0_17, %c0_18, %c0_19] : memref<2x16x1xf32, #tpu.memory_space<vmem>>, vector<1x16x1xf32>
    %23 = vector.shape_cast %22 : vector<1x16x1xf32> to vector<16x1xf32>
    %24 = vector.broadcast %23 : vector<16x1xf32> to vector<16x128xf32>
    %25 = arith.addf %21, %24 : vector<16x128xf32>
    %26 = math.tanh %25 : vector<16x128xf32>
    %c0_20 = arith.constant 0 : index
    %c0_21 = arith.constant 0 : index
    %c0_22 = arith.constant 0 : index
    %27 = vector.load %arg8[%c0_20, %c0_21, %c0_22] : memref<2x6x16xbf16, #tpu.memory_space<vmem>>, vector<1x6x16xbf16>
    %28 = vector.shape_cast %27 : vector<1x6x16xbf16> to vector<6x16xbf16>
    %29 = arith.truncf %26 : vector<16x128xf32> to vector<16x128xbf16>
    %cst_23 = arith.constant dense<0.000000e+00> : vector<6x128xf32>
    %30 = tpu.matmul %28, %29, %cst_23 {dimension_numbers = #tpu.dot_dimension_numbers<[1], [0], [0], [1], [0, 0, 1, 1], [], []>} : vector<6x16xbf16>, vector<16x128xbf16>, vector<6x128xf32> -> vector<6x128xf32>
    %c0_24 = arith.constant 0 : index
    %c0_25 = arith.constant 0 : index
    %c0_26 = arith.constant 0 : index
    %31 = vector.load %arg9[%c0_24, %c0_25, %c0_26] : memref<2x6x1xf32, #tpu.memory_space<vmem>>, vector<1x6x1xf32>
    %32 = vector.shape_cast %31 : vector<1x6x1xf32> to vector<6x1xf32>
    %33 = vector.broadcast %32 : vector<6x1xf32> to vector<6x128xf32>
    %34 = arith.addf %30, %33 : vector<6x128xf32>
    %35 = vector.extract_strided_slice %34 {offsets = [0, 0], sizes = [3, 128], strides = [1, 1]} : vector<6x128xf32> to vector<3x128xf32>
    %36 = vector.extract_strided_slice %34 {offsets = [3, 0], sizes = [3, 128], strides = [1, 1]} : vector<6x128xf32> to vector<3x128xf32>
    %37 = math.exp %36 : vector<3x128xf32>
    %38 = arith.mulf %2, %37 : vector<3x128xf32>
    %39 = arith.addf %35, %38 : vector<3x128xf32>
    %40 = arith.truncf %39 : vector<3x128xf32> to vector<3x128xbf16>
    %c1 = arith.constant 1 : index
    %c0_27 = arith.constant 0 : index
    %c0_28 = arith.constant 0 : index
    %41 = vector.load %arg3[%c1, %c0_27, %c0_28] : memref<2x16x3xbf16, #tpu.memory_space<vmem>>, vector<1x16x3xbf16>
    %42 = vector.shape_cast %41 : vector<1x16x3xbf16> to vector<16x3xbf16>
    %cst_29 = arith.constant dense<0.000000e+00> : vector<16x128xf32>
    %43 = tpu.matmul %42, %40, %cst_29 {dimension_numbers = #tpu.dot_dimension_numbers<[1], [0], [0], [1], [0, 0, 1, 1], [], []>} : vector<16x3xbf16>, vector<3x128xbf16>, vector<16x128xf32> -> vector<16x128xf32>
    %c1_30 = arith.constant 1 : index
    %c0_31 = arith.constant 0 : index
    %c0_32 = arith.constant 0 : index
    %44 = vector.load %arg4[%c1_30, %c0_31, %c0_32] : memref<2x16x5xbf16, #tpu.memory_space<vmem>>, vector<1x16x5xbf16>
    %45 = vector.shape_cast %44 : vector<1x16x5xbf16> to vector<16x5xbf16>
    %cst_33 = arith.constant dense<0.000000e+00> : vector<16x128xf32>
    %46 = tpu.matmul %45, %4, %cst_33 {dimension_numbers = #tpu.dot_dimension_numbers<[1], [0], [0], [1], [0, 0, 1, 1], [], []>} : vector<16x5xbf16>, vector<5x128xbf16>, vector<16x128xf32> -> vector<16x128xf32>
    %47 = arith.addf %43, %46 : vector<16x128xf32>
    %c1_34 = arith.constant 1 : index
    %c0_35 = arith.constant 0 : index
    %c0_36 = arith.constant 0 : index
    %48 = vector.load %arg5[%c1_34, %c0_35, %c0_36] : memref<2x16x1xf32, #tpu.memory_space<vmem>>, vector<1x16x1xf32>
    %49 = vector.shape_cast %48 : vector<1x16x1xf32> to vector<16x1xf32>
    %50 = vector.broadcast %49 : vector<16x1xf32> to vector<16x128xf32>
    %51 = arith.addf %47, %50 : vector<16x128xf32>
    %52 = math.tanh %51 : vector<16x128xf32>
    %c1_37 = arith.constant 1 : index
    %c0_38 = arith.constant 0 : index
    %c0_39 = arith.constant 0 : index
    %53 = vector.load %arg6[%c1_37, %c0_38, %c0_39] : memref<2x16x16xbf16, #tpu.memory_space<vmem>>, vector<1x16x16xbf16>
    %54 = vector.shape_cast %53 : vector<1x16x16xbf16> to vector<16x16xbf16>
    %55 = arith.truncf %52 : vector<16x128xf32> to vector<16x128xbf16>
    %cst_40 = arith.constant dense<0.000000e+00> : vector<16x128xf32>
    %56 = tpu.matmul %54, %55, %cst_40 {dimension_numbers = #tpu.dot_dimension_numbers<[1], [0], [0], [1], [0, 0, 1, 1], [], []>} : vector<16x16xbf16>, vector<16x128xbf16>, vector<16x128xf32> -> vector<16x128xf32>
    %c1_41 = arith.constant 1 : index
    %c0_42 = arith.constant 0 : index
    %c0_43 = arith.constant 0 : index
    %57 = vector.load %arg7[%c1_41, %c0_42, %c0_43] : memref<2x16x1xf32, #tpu.memory_space<vmem>>, vector<1x16x1xf32>
    %58 = vector.shape_cast %57 : vector<1x16x1xf32> to vector<16x1xf32>
    %59 = vector.broadcast %58 : vector<16x1xf32> to vector<16x128xf32>
    %60 = arith.addf %56, %59 : vector<16x128xf32>
    %61 = math.tanh %60 : vector<16x128xf32>
    %c1_44 = arith.constant 1 : index
    %c0_45 = arith.constant 0 : index
    %c0_46 = arith.constant 0 : index
    %62 = vector.load %arg8[%c1_44, %c0_45, %c0_46] : memref<2x6x16xbf16, #tpu.memory_space<vmem>>, vector<1x6x16xbf16>
    %63 = vector.shape_cast %62 : vector<1x6x16xbf16> to vector<6x16xbf16>
    %64 = arith.truncf %61 : vector<16x128xf32> to vector<16x128xbf16>
    %cst_47 = arith.constant dense<0.000000e+00> : vector<6x128xf32>
    %65 = tpu.matmul %63, %64, %cst_47 {dimension_numbers = #tpu.dot_dimension_numbers<[1], [0], [0], [1], [0, 0, 1, 1], [], []>} : vector<6x16xbf16>, vector<16x128xbf16>, vector<6x128xf32> -> vector<6x128xf32>
    %c1_48 = arith.constant 1 : index
    %c0_49 = arith.constant 0 : index
    %c0_50 = arith.constant 0 : index
    %66 = vector.load %arg9[%c1_48, %c0_49, %c0_50] : memref<2x6x1xf32, #tpu.memory_space<vmem>>, vector<1x6x1xf32>
    %67 = vector.shape_cast %66 : vector<1x6x1xf32> to vector<6x1xf32>
    %68 = vector.broadcast %67 : vector<6x1xf32> to vector<6x128xf32>
    %69 = arith.addf %65, %68 : vector<6x128xf32>
    %70 = vector.extract_strided_slice %69 {offsets = [0, 0], sizes = [3, 128], strides = [1, 1]} : vector<6x128xf32> to vector<3x128xf32>
    %71 = vector.extract_strided_slice %69 {offsets = [3, 0], sizes = [3, 128], strides = [1, 1]} : vector<6x128xf32> to vector<3x128xf32>
    %72 = math.exp %71 : vector<3x128xf32>
    %73 = arith.mulf %1, %72 : vector<3x128xf32>
    %74 = arith.addf %70, %73 : vector<3x128xf32>
    %75 = tpu.concatenate %74, %39 in 0 : vector<3x128xf32>, vector<3x128xf32> -> vector<6x128xf32>
    %c0_51 = arith.constant 0 : index
    %c0_52 = arith.constant 0 : index
    %76 = vector.load %arg10[%c0_51, %c0_52] : memref<6x128xf32, #tpu.memory_space<vmem>>, vector<6x128xf32>
    tpu.vector_store %arg10[%c0_51, %c0_52], %75 {strides = array<i32>} : memref<6x128xf32, #tpu.memory_space<vmem>>, vector<6x128xf32>,
    %cst_53 = arith.constant dense<0.000000e+00> : vector<128xf32>
    %77 = vector.multi_reduction <add>, %36, %cst_53 [0] : vector<3x128xf32> to vector<128xf32>
    %78 = vector.shape_cast %77 : vector<128xf32> to vector<1x128xf32>
    %cst_54 = arith.constant dense<0.000000e+00> : vector<128xf32>
    %79 = vector.multi_reduction <add>, %71, %cst_54 [0] : vector<3x128xf32> to vector<128xf32>
    %80 = vector.shape_cast %79 : vector<128xf32> to vector<1x128xf32>
    %81 = arith.addf %78, %80 : vector<1x128xf32>
    %c0_55 = arith.constant 0 : index
    %c0_56 = arith.constant 0 : index
    %82 = vector.load %arg11[%c0_55, %c0_56] : memref<1x128xf32, #tpu.memory_space<vmem>>, vector<1x128xf32>
    tpu.vector_store %arg11[%c0_55, %c0_56], %81 {strides = array<i32>} : memref<1x128xf32, #tpu.memory_space<vmem>>, vector<1x128xf32>,
    return
  }
  func.func @transform_0(%arg0: i32) -> (i32, i32) {
    %c0_i32 = arith.constant 0 : i32
    %c0_i32_0 = arith.constant 0 : i32
    return %c0_i32, %arg0 : i32, i32
  }
  func.func @transform_1(%arg0: i32) -> (i32, i32) {
    %c0_i32 = arith.constant 0 : i32
    %c0_i32_0 = arith.constant 0 : i32
    return %c0_i32, %arg0 : i32, i32
  }
  func.func @transform_2(%arg0: i32) -> (i32, i32, i32) {
    %c0_i32 = arith.constant 0 : i32
    %c0_i32_0 = arith.constant 0 : i32
    %c0_i32_1 = arith.constant 0 : i32
    %c0_i32_2 = arith.constant 0 : i32
    return %c0_i32, %c0_i32_0, %c0_i32_1 : i32, i32, i32
  }
  func.func @transform_3(%arg0: i32) -> (i32, i32, i32) {
    %c0_i32 = arith.constant 0 : i32
    %c0_i32_0 = arith.constant 0 : i32
    %c0_i32_1 = arith.constant 0 : i32
    %c0_i32_2 = arith.constant 0 : i32
    return %c0_i32, %c0_i32_0, %c0_i32_1 : i32, i32, i32
  }
  func.func @transform_4(%arg0: i32) -> (i32, i32, i32) {
    %c0_i32 = arith.constant 0 : i32
    %c0_i32_0 = arith.constant 0 : i32
    %c0_i32_1 = arith.constant 0 : i32
    %c0_i32_2 = arith.constant 0 : i32
    return %c0_i32, %c0_i32_0, %c0_i32_1 : i32, i32, i32
  }
  func.func @transform_5(%arg0: i32) -> (i32, i32, i32) {
    %c0_i32 = arith.constant 0 : i32
    %c0_i32_0 = arith.constant 0 : i32
    %c0_i32_1 = arith.constant 0 : i32
    %c0_i32_2 = arith.constant 0 : i32
    return %c0_i32, %c0_i32_0, %c0_i32_1 : i32, i32, i32
  }
  func.func @transform_6(%arg0: i32) -> (i32, i32, i32) {
    %c0_i32 = arith.constant 0 : i32
    %c0_i32_0 = arith.constant 0 : i32
    %c0_i32_1 = arith.constant 0 : i32
    %c0_i32_2 = arith.constant 0 : i32
    return %c0_i32, %c0_i32_0, %c0_i32_1 : i32, i32, i32
  }
  func.func @transform_7(%arg0: i32) -> (i32, i32, i32) {
    %c0_i32 = arith.constant 0 : i32
    %c0_i32_0 = arith.constant 0 : i32
    %c0_i32_1 = arith.constant 0 : i32
    %c0_i32_2 = arith.constant 0 : i32
    return %c0_i32, %c0_i32_0, %c0_i32_1 : i32, i32, i32
  }
  func.func @transform_8(%arg0: i32) -> (i32, i32, i32) {
    %c0_i32 = arith.constant 0 : i32
    %c0_i32_0 = arith.constant 0 : i32
    %c0_i32_1 = arith.constant 0 : i32
    %c0_i32_2 = arith.constant 0 : i32
    return %c0_i32, %c0_i32_0, %c0_i32_1 : i32, i32, i32
  }
  func.func @transform_9(%arg0: i32) -> (i32, i32) {
    %c0_i32 = arith.constant 0 : i32
    %c0_i32_0 = arith.constant 0 : i32
    return %c0_i32, %arg0 : i32, i32
  }
  func.func @transform_10(%arg0: i32) -> (i32, i32) {
    %c0_i32 = arith.constant 0 : i32
    %c0_i32_0 = arith.constant 0 : i32
    return %c0_i32, %arg0 : i32, i32
  }
}

</mosaic_0001>

<llo_original>
// kernel: realnvp_cond_forward.1
$region0: #{realnvp_cond_forward.1}
  #allocation0 [shape = 'u32[]', space=smem, size = 0x4, offset = 0x4, fixed_abs, tag = 'smem constant byte address 0x4 - core index']
  #allocation1 [shape = 'u32[144,128]{1,0:T(1,128)}', space=vmem, size = 0x12000, scoped, tag = 'internal scratch']
  %s0 = inlined_call_operand.vmem [shape: f32[6,128], index: 0, kind: input, shape index: {}]
  %s1 = inlined_call_operand.vmem [shape: f32[5,128], index: 1, kind: input, shape index: {}]
  %s2 = inlined_call_operand.vmem [shape: bf16[2,16,3], index: 2, kind: input, shape index: {}]
  %s3 = inlined_call_operand.vmem [shape: bf16[2,16,5], index: 3, kind: input, shape index: {}]
  %s4 = inlined_call_operand.vmem [shape: f32[2,16,1], index: 4, kind: input, shape index: {}]
  %s5 = inlined_call_operand.vmem [shape: bf16[2,16,16], index: 5, kind: input, shape index: {}]
  %s6 = inlined_call_operand.vmem [shape: f32[2,16,1], index: 6, kind: input, shape index: {}]
  %s7 = inlined_call_operand.vmem [shape: bf16[2,6,16], index: 7, kind: input, shape index: {}]
  %s8 = inlined_call_operand.vmem [shape: f32[2,6,1], index: 8, kind: input, shape index: {}]
  %s9 = inlined_call_operand.vmem [shape: f32[6,128], index: 9, kind: output, shape index: {0}]
  %s10 = inlined_call_operand.vmem [shape: f32[1,128], index: 10, kind: output, shape index: {1}]
  %11 = xla_tuple %s9, %s10
  %s12 = sld [smem:[#allocation0]]
  $region54: #{realnvp_cond_forward.1} parent=0
    _
  %s14 = ssub.s32 1, %s12
  %s15 = scalar_select 0, %s14, %s12
  // Predicated region
  $region2: #{realnvp_cond_forward.1} parent=0 // pred_check
    _
  $region3: #{realnvp_cond_forward.1} parent=0 // pred_check_branch
    %17 = sbr.rel (0) target = $region5
  $region4: #{realnvp_cond_forward.1} parent=0 // pred_region
    _
  $region5: #{realnvp_cond_forward.1} parent=0 // pred_fallthru
    _
  // Predicated region
  $region6: #{realnvp_cond_forward.1} parent=0 // pred_check
    _
  $region7: #{realnvp_cond_forward.1} parent=0 // pred_check_branch
    %19 = sbr.rel (0) target = $region9
  $region8: #{realnvp_cond_forward.1} parent=0 // pred_region
    _
  $region9: #{realnvp_cond_forward.1} parent=0 // pred_fallthru
    _
  // Predicated region
  $region10: #{realnvp_cond_forward.1} parent=0 // pred_check
    _
  $region11: #{realnvp_cond_forward.1} parent=0 // pred_check_branch
    %21 = sbr.rel (0) target = $region13
  $region12: #{realnvp_cond_forward.1} parent=0 // pred_region
    _
  $region13: #{realnvp_cond_forward.1} parent=0 // pred_fallthru
    _
  // Predicated region
  $region14: #{realnvp_cond_forward.1} parent=0 // pred_check
    _
  $region15: #{realnvp_cond_forward.1} parent=0 // pred_check_branch
    %23 = sbr.rel (0) target = $region17
  $region16: #{realnvp_cond_forward.1} parent=0 // pred_region
    _
  $region17: #{realnvp_cond_forward.1} parent=0 // pred_fallthru
    _
  // Predicated region
  $region18: #{realnvp_cond_forward.1} parent=0 // pred_check
    _
  $region19: #{realnvp_cond_forward.1} parent=0 // pred_check_branch
    %25 = sbr.rel (0) target = $region21
  $region20: #{realnvp_cond_forward.1} parent=0 // pred_region
    _
  $region21: #{realnvp_cond_forward.1} parent=0 // pred_fallthru
    _
  // Predicated region
  $region22: #{realnvp_cond_forward.1} parent=0 // pred_check
    _
  $region23: #{realnvp_cond_forward.1} parent=0 // pred_check_branch
    %27 = sbr.rel (0) target = $region25
  $region24: #{realnvp_cond_forward.1} parent=0 // pred_region
    _
  $region25: #{realnvp_cond_forward.1} parent=0 // pred_fallthru
    _
  // Predicated region
  $region26: #{realnvp_cond_forward.1} parent=0 // pred_check
    _
  $region27: #{realnvp_cond_forward.1} parent=0 // pred_check_branch
    %29 = sbr.rel (0) target = $region29
  $region28: #{realnvp_cond_forward.1} parent=0 // pred_region
    _
  $region29: #{realnvp_cond_forward.1} parent=0 // pred_fallthru
    _
  // Predicated region
  $region30: #{realnvp_cond_forward.1} parent=0 // pred_check
    _
  $region31: #{realnvp_cond_forward.1} parent=0 // pred_check_branch
    %31 = sbr.rel (0) target = $region33
  $region32: #{realnvp_cond_forward.1} parent=0 // pred_region
    _
  $region33: #{realnvp_cond_forward.1} parent=0 // pred_fallthru
    _
  // Predicated region
  $region34: #{realnvp_cond_forward.1} parent=0 // pred_check
    _
  $region35: #{realnvp_cond_forward.1} parent=0 // pred_check_branch
    %33 = sbr.rel (0) target = $region37
  $region36: #{realnvp_cond_forward.1} parent=0 // pred_region
    _
  $region37: #{realnvp_cond_forward.1} parent=0 // pred_fallthru
    _
  %v35 = vld [vmem:[%s0] sm:$0x3f]
  %v36 = vld [vmem:[%s1] sm:$0x1f]
  %v37 = vpack.c.bf16 %v36, %v36
  %v38 = vpack.c.bf16 %v35, %v35
  %v39 = vld [vmem:[%s2] sm:$0xf]
  %v40 = vld [vmem:[%s2 + $0x4] sm:$0xf]
  %v41 = vld [vmem:[%s3] sm:$0xf]
  %v42 = vld [vmem:[%s3 + $0x4] sm:$0xf]
  %v45 = vunpack.c.l.b16 %v41
  %v46 = vunpack.c.l.b16 %v42
  %v47 = vpack.c.b16 %v46, %v45
  %vm48 = vcmask 39936
  %v50 = vsel %vm48, %v47, 0
  %vm52 = vcmask 1041408
  %vm53 = vcmask 1042432
  %v54 = vsel %vm52, 4294967295, 65535
  %v55 = vsel %vm53, %v54, 0
  %v57 = vand.u32 %v37, %v55
  %59 = vmatprep.subr.bf16.mxu0 0
  %60 = vmatpush1.bf16.msra.mxu0 %v57
  %61 = vmatprep.subr.bf16.mxu0 0
  %62 = vmatpush1.bf16.msra.mxu0 0
  %63 = vmatprep.subr.bf16.mxu0 0
  %64 = vmatpush1.bf16.msra.mxu0 0
  %65 = vmatprep.subr.bf16.mxu0 0
  %66 = vmatpush1.bf16.msra.mxu0 0
  %67 = vmatprep.subr.bf16.mxu0 0
  %68 = vmatpush1.bf16.msra.mxu0 0
  %69 = vmatprep.subr.bf16.mxu0 0
  %70 = vmatpush1.bf16.msra.mxu0 0
  %71 = vmatprep.subr.bf16.mxu0 0
  %72 = vmatpush1.bf16.msra.mxu0 0
  %73 = vmatprep.subr.bf16.mxu0 0
  %74 = vmatpush1.bf16.msra.mxu0 0
  %75 = vmatprep.subr.bf16.mxu0 0
  %76 = vmatpush1.bf16.msra.mxu0 0
  %77 = vmatprep.subr.bf16.mxu0 0
  %78 = vmatpush1.bf16.msra.mxu0 0
  %79 = vmatprep.subr.bf16.mxu0 0
  %80 = vmatpush1.bf16.msra.mxu0 0
  %81 = vmatprep.subr.bf16.mxu0 0
  %82 = vmatpush1.bf16.msra.mxu0 0
  %83 = vmatprep.subr.bf16.mxu0 0
  %84 = vmatpush1.bf16.msra.mxu0 0
  %85 = vmatprep.subr.bf16.mxu0 0
  %86 = vmatpush1.bf16.msra.mxu0 0
  %87 = vmatprep.subr.bf16.mxu0 0
  %88 = vmatpush1.bf16.msra.mxu0 0
  %89 = vmatprep.subr.bf16.mxu0 0
  %90 = vmatpush1.bf16.msra.mxu0 0
  %91 = vmatprep.mubr.bf16.mxu0 0
  %92 = vmatmul.mubr.bf16.gmra.mrb[0].mxu0 %v50
  %v93 = vpop.f32.mrb[0].mxu0
  %v94 = vadd.f32 0.0, %v93
  %v95 = vpop.f32.mrb[0].mxu0
  %v96 = vpop.f32.mrb[0].mxu0
  %v97 = vadd.f32 0.0, %v96
  %v98 = vpop.f32.mrb[0].mxu0
  %99 = vdwg.mxu0
  %v102 = vunpack.c.l.b16 %v39
  %v103 = vunpack.c.l.b16 %v40
  %v104 = vpack.c.b16 %v103, %v102
  %vm105 = vcmask 23552
  %v107 = vsel %vm105, %v104, 0
  %vm109 = vcmask 1040384
  %v110 = vsel %vm109, 4294967295, 65535
  %v111 = vsel %vm52, %v110, 0
  %v113 = vand.u32 %v38, %v111
  %115 = vmatprep.subr.bf16.mxu0 0
  %116 = vmatpush1.bf16.msra.mxu0 %v113
  %117 = vmatprep.subr.bf16.mxu0 0
  %118 = vmatpush1.bf16.msra.mxu0 0
  %119 = vmatprep.subr.bf16.mxu0 0
  %120 = vmatpush1.bf16.msra.mxu0 0
  %121 = vmatprep.subr.bf16.mxu0 0
  %122 = vmatpush1.bf16.msra.mxu0 0
  %123 = vmatprep.subr.bf16.mxu0 0
  %124 = vmatpush1.bf16.msra.mxu0 0
  %125 = vmatprep.subr.bf16.mxu0 0
  %126 = vmatpush1.bf16.msra.mxu0 0
  %127 = vmatprep.subr.bf16.mxu0 0
  %128 = vmatpush1.bf16.msra.mxu0 0
  %129 = vmatprep.subr.bf16.mxu0 0
  %130 = vmatpush1.bf16.msra.mxu0 0
  %131 = vmatprep.subr.bf16.mxu0 0
  %132 = vmatpush1.bf16.msra.mxu0 0
  %133 = vmatprep.subr.bf16.mxu0 0
  %134 = vmatpush1.bf16.msra.mxu0 0
  %135 = vmatprep.subr.bf16.mxu0 0
  %136 = vmatpush1.bf16.msra.mxu0 0
  %137 = vmatprep.subr.bf16.mxu0 0
  %138 = vmatpush1.bf16.msra.mxu0 0
  %139 = vmatprep.subr.bf16.mxu0 0
  %140 = vmatpush1.bf16.msra.mxu0 0
  %141 = vmatprep.subr.bf16.mxu0 0
  %142 = vmatpush1.bf16.msra.mxu0 0
  %143 = vmatprep.subr.bf16.mxu0 0
  %144 = vmatpush1.bf16.msra.mxu0 0
  %145 = vmatprep.subr.bf16.mxu0 0
  %146 = vmatpush1.bf16.msra.mxu0 0
  %147 = vmatprep.mubr.bf16.mxu0 0
  %148 = vmatmul.mubr.bf16.gmra.mrb[0].mxu0 %v107
  %v149 = vpop.f32.mrb[0].mxu0
  %v150 = vadd.f32 %v94, %v149
  %v151 = vpop.f32.mrb[0].mxu0
  %v152 = vpop.f32.mrb[0].mxu0
  %v153 = vadd.f32 %v97, %v152
  %v154 = vpop.f32.mrb[0].mxu0
  %155 = vdwg.mxu0
  %v156 = vld [vmem:[%s4] sm:$0xff]
  %v157 = vld [vmem:[%s4 + $0x8] sm:$0xff]
  %159 = vset.pattern.permute.xlu0 0
  %160 = vperm.xlu0 %159, %v156
  %v161 = vpop.permute.xlu0 %160
  %164 = vset.pattern.permute.xlu0 0
  %165 = vperm.xlu0 %164, %v157
  %v166 = vpop.permute.xlu0 %165
  %v168 = vadd.f32 %v150, %v161
  %v169 = vadd.f32 %v153, %v166
  %v170 = vtanh.pop %v168
  %v171 = vtanh.pop %v169
  %v172 = vld [vmem:[%s5] sm:$0xf]
  %v173 = vld [vmem:[%s5 + $0x4] sm:$0xf]
  %v174 = vpack.c.bf16 %v171, %v170
  %v175 = vld [vmem:[%s6] sm:$0xff]
  %v176 = vld [vmem:[%s6 + $0x8] sm:$0xff]
  %178 = vset.pattern.permute.xlu0 0
  %179 = vperm.xlu0 %178, %v175
  %v180 = vpop.permute.xlu0 %179
  %183 = vset.pattern.permute.xlu0 0
  %184 = vperm.xlu0 %183, %v176
  %v185 = vpop.permute.xlu0 %184
  %v189 = vunpack.c.l.b16 %v172
  %v190 = vunpack.c.l.b16 %v173
  %v191 = vpack.c.b16 %v190, %v189
  %vm192 = vcmask 130048
  %v194 = vsel %vm192, %v191, 0
  %196 = vmatprep.subr.bf16.mxu0 0
  %197 = vmatpush1.bf16.msra.mxu0 %v174
  %198 = vmatprep.subr.bf16.mxu0 0
  %199 = vmatpush1.bf16.msra.mxu0 0
  %200 = vmatprep.subr.bf16.mxu0 0
  %201 = vmatpush1.bf16.msra.mxu0 0
  %202 = vmatprep.subr.bf16.mxu0 0
  %203 = vmatpush1.bf16.msra.mxu0 0
  %204 = vmatprep.subr.bf16.mxu0 0
  %205 = vmatpush1.bf16.msra.mxu0 0
  %206 = vmatprep.subr.bf16.mxu0 0
  %207 = vmatpush1.bf16.msra.mxu0 0
  %208 = vmatprep.subr.bf16.mxu0 0
  %209 = vmatpush1.bf16.msra.mxu0 0
  %210 = vmatprep.subr.bf16.mxu0 0
  %211 = vmatpush1.bf16.msra.mxu0 0
  %212 = vmatprep.subr.bf16.mxu0 0
  %213 = vmatpush1.bf16.msra.mxu0 0
  %214 = vmatprep.subr.bf16.mxu0 0
  %215 = vmatpush1.bf16.msra.mxu0 0
  %216 = vmatprep.subr.bf16.mxu0 0
  %217 = vmatpush1.bf16.msra.mxu0 0
  %218 = vmatprep.subr.bf16.mxu0 0
  %219 = vmatpush1.bf16.msra.mxu0 0
  %220 = vmatprep.subr.bf16.mxu0 0
  %221 = vmatpush1.bf16.msra.mxu0 0
  %222 = vmatprep.subr.bf16.mxu0 0
  %223 = vmatpush1.bf16.msra.mxu0 0
  %224 = vmatprep.subr.bf16.mxu0 0
  %225 = vmatpush1.bf16.msra.mxu0 0
  %226 = vmatprep.subr.bf16.mxu0 0
  %227 = vmatpush1.bf16.msra.mxu0 0
  %228 = vmatprep.mubr.bf16.mxu0 0
  %229 = vmatmul.mubr.bf16.gmra.mrb[0].mxu0 %v194
  %v230 = vpop.f32.mrb[0].mxu0
  %v231 = vadd.f32 %v180, %v230
  %v232 = vpop.f32.mrb[0].mxu0
  %v233 = vpop.f32.mrb[0].mxu0
  %v234 = vadd.f32 %v185, %v233
  %v235 = vpop.f32.mrb[0].mxu0
  %236 = vdwg.mxu0
  %v237 = vtanh.pop %v231
  %v238 = vtanh.pop %v234
  %v239 = vld [vmem:[%s7] sm:$0x7]
  %v240 = vpack.c.bf16 %v238, %v237
  %v241 = vld [vmem:[%s8] sm:$0x3f]
  %243 = vset.pattern.permute.xlu0 0
  %244 = vperm.xlu0 %243, %v241
  %v245 = vpop.permute.xlu0 %244
  %v248 = vsel %vm192, %v239, 0
  %250 = vmatprep.subr.bf16.mxu0 0
  %251 = vmatpush1.bf16.msra.mxu0 %v240
  %252 = vmatprep.subr.bf16.mxu0 0
  %253 = vmatpush1.bf16.msra.mxu0 0
  %254 = vmatprep.subr.bf16.mxu0 0
  %255 = vmatpush1.bf16.msra.mxu0 0
  %256 = vmatprep.subr.bf16.mxu0 0
  %257 = vmatpush1.bf16.msra.mxu0 0
  %258 = vmatprep.subr.bf16.mxu0 0
  %259 = vmatpush1.bf16.msra.mxu0 0
  %260 = vmatprep.subr.bf16.mxu0 0
  %261 = vmatpush1.bf16.msra.mxu0 0
  %262 = vmatprep.subr.bf16.mxu0 0
  %263 = vmatpush1.bf16.msra.mxu0 0
  %264 = vmatprep.subr.bf16.mxu0 0
  %265 = vmatpush1.bf16.msra.mxu0 0
  %266 = vmatprep.subr.bf16.mxu0 0
  %267 = vmatpush1.bf16.msra.mxu0 0
  %268 = vmatprep.subr.bf16.mxu0 0
  %269 = vmatpush1.bf16.msra.mxu0 0
  %270 = vmatprep.subr.bf16.mxu0 0
  %271 = vmatpush1.bf16.msra.mxu0 0
  %272 = vmatprep.subr.bf16.mxu0 0
  %273 = vmatpush1.bf16.msra.mxu0 0
  %274 = vmatprep.subr.bf16.mxu0 0
  %275 = vmatpush1.bf16.msra.mxu0 0
  %276 = vmatprep.subr.bf16.mxu0 0
  %277 = vmatpush1.bf16.msra.mxu0 0
  %278 = vmatprep.subr.bf16.mxu0 0
  %279 = vmatpush1.bf16.msra.mxu0 0
  %280 = vmatprep.subr.bf16.mxu0 0
  %281 = vmatpush1.bf16.msra.mxu0 0
  %282 = vmatprep.mubr.bf16.mxu0 0
  %283 = vmatmul.mubr.bf16.gmra.mrb[0].mxu0 %v248
  %v284 = vpop.f32.mrb[0].mxu0
  %v285 = vadd.f32 %v245, %v284
  %v286 = vpop.f32.mrb[0].mxu0
  %v287 = vpop.f32.mrb[0].mxu0
  %v288 = vpop.f32.mrb[0].mxu0
  %289 = vdwg.mxu0
  %v290 = vmul.f32 %v285, 1.442695
  %v291 = vpow.pop %v290
  %v292 = vmul.f32 %v35, %v291
  %v294 = vrot.slane %v292, 3
  %v296 = vadd.f32 %v285, %v294
  %v297 = vpack.c.bf16 %v296, %v296
  %s298 = scalar_lea.vmem %s2, 8
  %v299 = vld [vmem:[%s298] sm:$0xf]
  %v300 = vld [vmem:[%s298 + $0x4] sm:$0xf]
  %s301 = scalar_lea.vmem %s3, 8
  %v302 = vld [vmem:[%s301] sm:$0xf]
  %v303 = vld [vmem:[%s301 + $0x4] sm:$0xf]
  %v306 = vunpack.c.l.b16 %v302
  %v307 = vunpack.c.l.b16 %v303
  %v308 = vpack.c.b16 %v307, %v306
  %v310 = vsel %vm48, %v308, 0
  %312 = vmatprep.subr.bf16.mxu0 0
  %313 = vmatpush1.bf16.msra.mxu0 %v57
  %314 = vmatprep.subr.bf16.mxu0 0
  %315 = vmatpush1.bf16.msra.mxu0 0
  %316 = vmatprep.subr.bf16.mxu0 0
  %317 = vmatpush1.bf16.msra.mxu0 0
  %318 = vmatprep.subr.bf16.mxu0 0
  %319 = vmatpush1.bf16.msra.mxu0 0
  %320 = vmatprep.subr.bf16.mxu0 0
  %321 = vmatpush1.bf16.msra.mxu0 0
  %322 = vmatprep.subr.bf16.mxu0 0
  %323 = vmatpush1.bf16.msra.mxu0 0
  %324 = vmatprep.subr.bf16.mxu0 0
  %325 = vmatpush1.bf16.msra.mxu0 0
  %326 = vmatprep.subr.bf16.mxu0 0
  %327 = vmatpush1.bf16.msra.mxu0 0
  %328 = vmatprep.subr.bf16.mxu0 0
  %329 = vmatpush1.bf16.msra.mxu0 0
  %330 = vmatprep.subr.bf16.mxu0 0
  %331 = vmatpush1.bf16.msra.mxu0 0
  %332 = vmatprep.subr.bf16.mxu0 0
  %333 = vmatpush1.bf16.msra.mxu0 0
  %334 = vmatprep.subr.bf16.mxu0 0
  %335 = vmatpush1.bf16.msra.mxu0 0
  %336 = vmatprep.subr.bf16.mxu0 0
  %337 = vmatpush1.bf16.msra.mxu0 0
  %338 = vmatprep.subr.bf16.mxu0 0
  %339 = vmatpush1.bf16.msra.mxu0 0
  %340 = vmatprep.subr.bf16.mxu0 0
  %341 = vmatpush1.bf16.msra.mxu0 0
  %342 = vmatprep.subr.bf16.mxu0 0
  %343 = vmatpush1.bf16.msra.mxu0 0
  %344 = vmatprep.mubr.bf16.mxu0 0
  %345 = vmatmul.mubr.bf16.gmra.mrb[0].mxu0 %v310
  %v346 = vpop.f32.mrb[0].mxu0
  %v347 = vadd.f32 0.0, %v346
  %v348 = vpop.f32.mrb[0].mxu0
  %v349 = vpop.f32.mrb[0].mxu0
  %v350 = vadd.f32 0.0, %v349
  %v351 = vpop.f32.mrb[0].mxu0
  %352 = vdwg.mxu0
  %v355 = vunpack.c.l.b16 %v299
  %v356 = vunpack.c.l.b16 %v300
  %v357 = vpack.c.b16 %v356, %v355
  %v359 = vsel %vm105, %v357, 0
  %v362 = vand.u32 %v297, %v111
  %364 = vmatprep.subr.bf16.mxu0 0
  %365 = vmatpush1.bf16.msra.mxu0 %v362
  %366 = vmatprep.subr.bf16.mxu0 0
  %367 = vmatpush1.bf16.msra.mxu0 0
  %368 = vmatprep.subr.bf16.mxu0 0
  %369 = vmatpush1.bf16.msra.mxu0 0
  %370 = vmatprep.subr.bf16.mxu0 0
  %371 = vmatpush1.bf16.msra.mxu0 0
  %372 = vmatprep.subr.bf16.mxu0 0
  %373 = vmatpush1.bf16.msra.mxu0 0
  %374 = vmatprep.subr.bf16.mxu0 0
  %375 = vmatpush1.bf16.msra.mxu0 0
  %376 = vmatprep.subr.bf16.mxu0 0
  %377 = vmatpush1.bf16.msra.mxu0 0
  %378 = vmatprep.subr.bf16.mxu0 0
  %379 = vmatpush1.bf16.msra.mxu0 0
  %380 = vmatprep.subr.bf16.mxu0 0
  %381 = vmatpush1.bf16.msra.mxu0 0
  %382 = vmatprep.subr.bf16.mxu0 0
  %383 = vmatpush1.bf16.msra.mxu0 0
  %384 = vmatprep.subr.bf16.mxu0 0
  %385 = vmatpush1.bf16.msra.mxu0 0
  %386 = vmatprep.subr.bf16.mxu0 0
  %387 = vmatpush1.bf16.msra.mxu0 0
  %388 = vmatprep.subr.bf16.mxu0 0
  %389 = vmatpush1.bf16.msra.mxu0 0
  %390 = vmatprep.subr.bf16.mxu0 0
  %391 = vmatpush1.bf16.msra.mxu0 0
  %392 = vmatprep.subr.bf16.mxu0 0
  %393 = vmatpush1.bf16.msra.mxu0 0
  %394 = vmatprep.subr.bf16.mxu0 0
  %395 = vmatpush1.bf16.msra.mxu0 0
  %396 = vmatprep.mubr.bf16.mxu0 0
  %397 = vmatmul.mubr.bf16.gmra.mrb[0].mxu0 %v359
  %v398 = vpop.f32.mrb[0].mxu0
  %v399 = vadd.f32 %v347, %v398
  %v400 = vpop.f32.mrb[0].mxu0
  %v401 = vpop.f32.mrb[0].mxu0
  %v402 = vadd.f32 %v350, %v401
  %v403 = vpop.f32.mrb[0].mxu0
  %404 = vdwg.mxu0
  %s405 = scalar_lea.vmem %s4, 16
  %v406 = vld [vmem:[%s405] sm:$0xff]
  %v407 = vld [vmem:[%s405 + $0x8] sm:$0xff]
  %409 = vset.pattern.permute.xlu0 0
  %410 = vperm.xlu0 %409, %v406
  %v411 = vpop.permute.xlu0 %410
  %414 = vset.pattern.permute.xlu0 0
  %415 = vperm.xlu0 %414, %v407
  %v416 = vpop.permute.xlu0 %415
  %v418 = vadd.f32 %v399, %v411
  %v419 = vadd.f32 %v402, %v416
  %v420 = vtanh.pop %v418
  %v421 = vtanh.pop %v419
  %s422 = scalar_lea.vmem %s5, 8
  %v423 = vld [vmem:[%s422] sm:$0xf]
  %v424 = vld [vmem:[%s422 + $0x4] sm:$0xf]
  %v425 = vpack.c.bf16 %v421, %v420
  %s426 = scalar_lea.vmem %s6, 16
  %v427 = vld [vmem:[%s426] sm:$0xff]
  %v428 = vld [vmem:[%s426 + $0x8] sm:$0xff]
  %430 = vset.pattern.permute.xlu0 0
  %431 = vperm.xlu0 %430, %v427
  %v432 = vpop.permute.xlu0 %431
  %435 = vset.pattern.permute.xlu0 0
  %436 = vperm.xlu0 %435, %v428
  %v437 = vpop.permute.xlu0 %436
  %v441 = vunpack.c.l.b16 %v423
  %v442 = vunpack.c.l.b16 %v424
  %v443 = vpack.c.b16 %v442, %v441
  %v445 = vsel %vm192, %v443, 0
  %447 = vmatprep.subr.bf16.mxu0 0
  %448 = vmatpush1.bf16.msra.mxu0 %v425
  %449 = vmatprep.subr.bf16.mxu0 0
  %450 = vmatpush1.bf16.msra.mxu0 0
  %451 = vmatprep.subr.bf16.mxu0 0
  %452 = vmatpush1.bf16.msra.mxu0 0
  %453 = vmatprep.subr.bf16.mxu0 0
  %454 = vmatpush1.bf16.msra.mxu0 0
  %455 = vmatprep.subr.bf16.mxu0 0
  %456 = vmatpush1.bf16.msra.mxu0 0
  %457 = vmatprep.subr.bf16.mxu0 0
  %458 = vmatpush1.bf16.msra.mxu0 0
  %459 = vmatprep.subr.bf16.mxu0 0
  %460 = vmatpush1.bf16.msra.mxu0 0
  %461 = vmatprep.subr.bf16.mxu0 0
  %462 = vmatpush1.bf16.msra.mxu0 0
  %463 = vmatprep.subr.bf16.mxu0 0
  %464 = vmatpush1.bf16.msra.mxu0 0
  %465 = vmatprep.subr.bf16.mxu0 0
  %466 = vmatpush1.bf16.msra.mxu0 0
  %467 = vmatprep.subr.bf16.mxu0 0
  %468 = vmatpush1.bf16.msra.mxu0 0
  %469 = vmatprep.subr.bf16.mxu0 0
  %470 = vmatpush1.bf16.msra.mxu0 0
  %471 = vmatprep.subr.bf16.mxu0 0
  %472 = vmatpush1.bf16.msra.mxu0 0
  %473 = vmatprep.subr.bf16.mxu0 0
  %474 = vmatpush1.bf16.msra.mxu0 0
  %475 = vmatprep.subr.bf16.mxu0 0
  %476 = vmatpush1.bf16.msra.mxu0 0
  %477 = vmatprep.subr.bf16.mxu0 0
  %478 = vmatpush1.bf16.msra.mxu0 0
  %479 = vmatprep.mubr.bf16.mxu0 0
  %480 = vmatmul.mubr.bf16.gmra.mrb[0].mxu0 %v445
  %v481 = vpop.f32.mrb[0].mxu0
  %v482 = vadd.f32 %v432, %v481
  %v483 = vpop.f32.mrb[0].mxu0
  %v484 = vpop.f32.mrb[0].mxu0
  %v485 = vadd.f32 %v437, %v484
  %v486 = vpop.f32.mrb[0].mxu0
  %487 = vdwg.mxu0
  %v488 = vtanh.pop %v482
  %v489 = vtanh.pop %v485
  %s490 = scalar_lea.vmem %s7, 4
  %v491 = vld [vmem:[%s490] sm:$0x7]
  %v492 = vpack.c.bf16 %v489, %v488
  %s493 = scalar_lea.vmem %s8, 8
  %v494 = vld [vmem:[%s493] sm:$0x3f]
  %496 = vset.pattern.permute.xlu0 0
  %497 = vperm.xlu0 %496, %v494
  %v498 = vpop.permute.xlu0 %497
  %v501 = vsel %vm192, %v491, 0
  %503 = vmatprep.subr.bf16.mxu0 0
  %504 = vmatpush1.bf16.msra.mxu0 %v492
  %505 = vmatprep.subr.bf16.mxu0 0
  %506 = vmatpush1.bf16.msra.mxu0 0
  %507 = vmatprep.subr.bf16.mxu0 0
  %508 = vmatpush1.bf16.msra.mxu0 0
  %509 = vmatprep.subr.bf16.mxu0 0
  %510 = vmatpush1.bf16.msra.mxu0 0
  %511 = vmatprep.subr.bf16.mxu0 0
  %512 = vmatpush1.bf16.msra.mxu0 0
  %513 = vmatprep.subr.bf16.mxu0 0
  %514 = vmatpush1.bf16.msra.mxu0 0
  %515 = vmatprep.subr.bf16.mxu0 0
  %516 = vmatpush1.bf16.msra.mxu0 0
  %517 = vmatprep.subr.bf16.mxu0 0
  %518 = vmatpush1.bf16.msra.mxu0 0
  %519 = vmatprep.subr.bf16.mxu0 0
  %520 = vmatpush1.bf16.msra.mxu0 0
  %521 = vmatprep.subr.bf16.mxu0 0
  %522 = vmatpush1.bf16.msra.mxu0 0
  %523 = vmatprep.subr.bf16.mxu0 0
  %524 = vmatpush1.bf16.msra.mxu0 0
  %525 = vmatprep.subr.bf16.mxu0 0
  %526 = vmatpush1.bf16.msra.mxu0 0
  %527 = vmatprep.subr.bf16.mxu0 0
  %528 = vmatpush1.bf16.msra.mxu0 0
  %529 = vmatprep.subr.bf16.mxu0 0
  %530 = vmatpush1.bf16.msra.mxu0 0
  %531 = vmatprep.subr.bf16.mxu0 0
  %532 = vmatpush1.bf16.msra.mxu0 0
  %533 = vmatprep.subr.bf16.mxu0 0
  %534 = vmatpush1.bf16.msra.mxu0 0
  %535 = vmatprep.mubr.bf16.mxu0 0
  %536 = vmatmul.mubr.bf16.gmra.mrb[0].mxu0 %v501
  %v537 = vpop.f32.mrb[0].mxu0
  %v538 = vadd.f32 %v498, %v537
  %v539 = vpop.f32.mrb[0].mxu0
  %v540 = vpop.f32.mrb[0].mxu0
  %v541 = vpop.f32.mrb[0].mxu0
  %542 = vdwg.mxu0
  %v543 = vmul.f32 %v538, 1.442695
  %v544 = vpow.pop %v543
  %v546 = vrot.slane %v544, 3
  %v548 = vmul.f32 %v35, %v546
  %v549 = vadd.f32 %v538, %v548
  %v551 = vrot.slane %v296, 5
  %v553 = vsel %vm53, %v549, %v551
  %554 = vst [vmem:[%s9] sm:$0x3f] %v553
  %v556 = vrot.slane %v285, 3
  %v558 = vsel %vm53, %v556, 0.0
  %v559 = vrot.slane %v558, 4
  %v560 = vadd.f32 %v558, %v559
  %v561 = vrot.slane %v560, 2
  %v562 = vadd.f32 %v560, %v561
  %v563 = vrot.slane %v562, 1
  %v564 = vadd.f32 %v562, %v563
  %v566 = vrot.slane %v538, 3
  %v568 = vsel %vm53, %v566, 0.0
  %v569 = vrot.slane %v568, 4
  %v570 = vadd.f32 %v568, %v569
  %v571 = vrot.slane %v570, 2
  %v572 = vadd.f32 %v570, %v571
  %v573 = vrot.slane %v572, 1
  %v574 = vadd.f32 %v572, %v573
  %v575 = vadd.f32 %v564, %v574
  %576 = vst [vmem:[%s10] sm:$0x1] %v575
  // Predicated region
  $region38: #{realnvp_cond_forward.1} parent=0 // pred_check
    _
  $region39: #{realnvp_cond_forward.1} parent=0 // pred_check_branch
    %578 = sbr.rel (0) target = $region41
  $region40: #{realnvp_cond_forward.1} parent=0 // pred_region
    _
  $region41: #{realnvp_cond_forward.1} parent=0 // pred_fallthru
    _
  // Predicated region
  $region42: #{realnvp_cond_forward.1} parent=0 // pred_check
    _
  $region43: #{realnvp_cond_forward.1} parent=0 // pred_check_branch
    %580 = sbr.rel (0) target = $region45
  $region44: #{realnvp_cond_forward.1} parent=0 // pred_region
    _
  $region45: #{realnvp_cond_forward.1} parent=0 // pred_fallthru
    _
  // Predicated region
  $region46: #{realnvp_cond_forward.1} parent=0 // pred_check
    _
  $region47: #{realnvp_cond_forward.1} parent=0 // pred_check_branch
    %582 = sbr.rel (0) target = $region49
  $region48: #{realnvp_cond_forward.1} parent=0 // pred_region
    _
  $region49: #{realnvp_cond_forward.1} parent=0 // pred_fallthru
    _
  // Predicated region
  $region50: #{realnvp_cond_forward.1} parent=0 // pred_check
    _
  $region51: #{realnvp_cond_forward.1} parent=0 // pred_check_branch
    %584 = sbr.rel (0) target = $region53
  $region52: #{realnvp_cond_forward.1} parent=0 // pred_region
    _
  $region53: #{realnvp_cond_forward.1} parent=0 // pred_fallthru
    _

</llo_original>
